<compile_context>
chip_gen: v6e
topology: v6e:2x2x1
jax: 0.10.0
libtpu: 0.0.40
codegen_flags: <defaults>
</compile_context>

<pallas_src>
import jax
import jax.numpy as jnp
from jax.experimental import pallas as pl
from jax.experimental.pallas import tpu as pltpu


def _round_up(x, m):
    return (x + m - 1) // m * m


# ----------------------------------------------------------------------------
# Kernels
# ----------------------------------------------------------------------------
def _lora_fused_kernel(x_ref, wt_ref, o_ref):
    # x_ref: (TM, Cin), wt_ref: (Cin, Cout) resident (scale already folded in),
    # o_ref: (TM, Cout).  Single MXU pass per row tile.
    o_ref[...] = jnp.dot(
        x_ref[...], wt_ref[...], preferred_element_type=jnp.float32
    ).astype(o_ref.dtype)


def _lora_two_stage_kernel(x_ref, bt_ref, at_ref, o_ref, tmp_ref):
    # x_ref:  (TM, Cin)   row tile
    # bt_ref: (Cin, R)    resident down-projection (pre-transposed, pre-scaled)
    # at_ref: (R, TN)     up-projection column tile (pre-transposed)
    # o_ref:  (TM, TN)    output tile
    # tmp_ref:(TM, R)     f32 VMEM scratch holding the rank intermediate
    #
    # Cout is the inner grid axis: recompute the rank intermediate only when
    # the row tile changes (j == 0) and reuse it for every output column tile.
    @pl.when(pl.program_id(1) == 0)
    def _():
        tmp_ref[...] = jnp.dot(
            x_ref[...], bt_ref[...], preferred_element_type=jnp.float32
        )

    o_ref[...] = jnp.dot(
        tmp_ref[...].astype(x_ref.dtype), at_ref[...],
        preferred_element_type=jnp.float32,
    ).astype(o_ref.dtype)


# ----------------------------------------------------------------------------
# Wrapper
# ----------------------------------------------------------------------------
def lora_forward(x, A, B, scale, *, block_m=512, block_n=512,
                 fuse_small_cout=True):
    """LoRA forward pass: scale * ((x @ B.T) @ A.T).

    x: (..., in_channels); A: (out_channels, rank); B: (rank, in_channels).
    """
    orig_shape = x.shape
    cin = orig_shape[-1]
    cout, rank = A.shape
    assert B.shape == (rank, cin)

    x2d = x.reshape(-1, cin)
    m = x2d.shape[0]
    out_dtype = x.dtype
    scale_f32 = jnp.asarray(scale, jnp.float32)

    # Row tile: multiple of 8 sublanes; pad M so the grid divides evenly.
    block_m = max(8, _round_up(block_m, 8))
    tm = min(block_m, _round_up(m, 8))
    m_pad = _round_up(m, tm)
    if m_pad != m:
        x2d = jnp.pad(x2d, ((0, m_pad - m), (0, 0)))
    grid_m = m_pad // tm

    if fuse_small_cout and cout <= 256:
        # Tiny output: fold scale * (B^T @ A^T) into one resident weight once
        # in the wrapper; strictly fewer MXU pushes than a two-stage kernel
        # with a rank-4 contraction.
        wt = (scale_f32 * jnp.dot(B.T.astype(jnp.float32),
                                  A.T.astype(jnp.float32),
                                  precision="highest")).astype(x.dtype)
        out2d = pl.pallas_call(
            _lora_fused_kernel,
            out_shape=jax.ShapeDtypeStruct((m_pad, cout), out_dtype),
            grid_spec=pltpu.PrefetchScalarGridSpec(
                num_scalar_prefetch=0,
                grid=(grid_m,),
                in_specs=[
                    pl.BlockSpec((tm, cin), lambda i: (i, 0)),    # x row tile
                    pl.BlockSpec((cin, cout), lambda i: (0, 0)),  # W^T resident
                ],
                out_specs=pl.BlockSpec((tm, cout), lambda i: (i, 0)),
            ),
            compiler_params=pltpu.CompilerParams(
                dimension_semantics=("parallel",)),
        )(x2d, wt)
    else:
        # General two-stage LoRA, tiled over rows and output columns.
        n_candidates = [c for c in (512, 256, 128) if c <= max(block_n, 128)]
        tn = next((c for c in n_candidates if cout % c == 0), cout)
        grid_n = cout // tn

        # Pre-transposed, MXU-ready weights in the activation dtype (one-time
        # cast in the wrapper).  Fold `scale` into the rank-side weight B^T so
        # the kernel needs no scalar multiply at all.
        bt = (scale_f32 * B.T.astype(jnp.float32)).astype(x.dtype)  # (Cin, R)
        at = A.T.astype(x.dtype)                                    # (R, Cout)

        out2d = pl.pallas_call(
            _lora_two_stage_kernel,
            out_shape=jax.ShapeDtypeStruct((m_pad, cout), out_dtype),
            grid_spec=pltpu.PrefetchScalarGridSpec(
                num_scalar_prefetch=0,
                grid=(grid_m, grid_n),
                in_specs=[
                    pl.BlockSpec((tm, cin), lambda i, j: (i, 0)),    # x tile
                    pl.BlockSpec((cin, rank), lambda i, j: (0, 0)),  # B^T resident
                    pl.BlockSpec((rank, tn), lambda i, j: (0, j)),   # A^T col tile
                ],
                out_specs=pl.BlockSpec((tm, tn), lambda i, j: (i, j)),
                scratch_shapes=[pltpu.VMEM((tm, rank), jnp.float32)],
            ),
            compiler_params=pltpu.CompilerParams(
                dimension_semantics=("parallel", "arbitrary")),
        )(x2d, bt, at)

    if m_pad != m:
        out2d = out2d[:m]
    return out2d.reshape(*orig_shape[:-1], cout)


# ----------------------------------------------------------------------------
# Demo / self-check
# ----------------------------------------------------------------------------
if __name__ == "__main__":
    k1, k2, k3, k4, k5, k6 = jax.random.split(jax.random.PRNGKey(0), 6)

    # --- Test 1: module-consistent small shapes (fused small-Cout path). ----
    batch, seq = 2, 8
    cin, cout, rank = 32, 32, 4
    A1 = jax.random.normal(k1, (cout, rank), dtype=jnp.float32) * 0.01
    B1 = jax.random.normal(k2, (rank, cin), dtype=jnp.float32) * 0.01
    x1 = jax.random.normal(k3, (batch, seq, cin), dtype=jnp.float32)
    s1 = jnp.float32(1.0)

    out1 = jax.block_until_ready(lora_forward(x1, A1, B1, s1))
    ref1 = s1 * jnp.dot(jnp.dot(x1, B1.T, precision="highest"),
                        A1.T, precision="highest")
    assert out1.shape == (batch, seq, cout)
    assert jnp.allclose(out1, ref1, atol=2e-5, rtol=2e-2), "fused path mismatch"

    # --- Test 2: larger shapes exercising the tiled two-stage path ----------
    # (M=240 -> padded to 256, grid_m=2; Cout=384 -> TN=128, grid_n=3).
    batch2, seq2 = 2, 120
    cin2, cout2, rank2 = 384, 384, 8
    A2 = jax.random.normal(k4, (cout2, rank2), dtype=jnp.float32) * 0.01
    B2 = jax.random.normal(k5, (rank2, cin2), dtype=jnp.float32) * 0.01
    x2 = jax.random.normal(k6, (batch2, seq2, cin2), dtype=jnp.float32)
    s2 = jnp.float32(0.5)

    out2 = jax.block_until_ready(
        lora_forward(x2, A2, B2, s2, block_m=128, fuse_small_cout=False))
    ref2 = s2 * jnp.dot(jnp.dot(x2, B2.T, precision="highest"),
                        A2.T, precision="highest")
    assert out2.shape == (batch2, seq2, cout2)
    assert jnp.allclose(out2, ref2, atol=2e-5, rtol=2e-2), "two-stage mismatch"

    print("KERNEL_OK")
</pallas_src>

<mosaic_0001>
module attributes {stable_mosaic.version = 11 : i64} {
  func.func @_lora_fused_kernel(%arg0: i32, %arg1: memref<16x32xf32, #tpu.memory_space<vmem>>, %arg2: memref<32x32xf32, #tpu.memory_space<vmem>>, %arg3: memref<16x32xf32, #tpu.memory_space<vmem>>) attributes {dimension_semantics = [#tpu.dimension_semantics<parallel>], iteration_bounds = array<i64: 1>, scalar_prefetch = 0 : i64, scratch_operands = 0 : i64, tpu.core_type = #tpu.core_type<tc>, window_params = [{transform_indices = @transform_0, window_bounds = array<i64: 16, 32>}, {pipeline_mode = #tpu.pipeline_mode<synchronous>, transform_indices = @transform_1, window_bounds = array<i64: 32, 32>}, {transform_indices = @transform_2, window_bounds = array<i64: 16, 32>}]} {
    %c0 = arith.constant 0 : index
    %c0_0 = arith.constant 0 : index
    %0 = vector.load %arg1[%c0, %c0_0] : memref<16x32xf32, #tpu.memory_space<vmem>>, vector<16x32xf32>
    %c0_1 = arith.constant 0 : index
    %c0_2 = arith.constant 0 : index
    %1 = vector.load %arg2[%c0_1, %c0_2] : memref<32x32xf32, #tpu.memory_space<vmem>>, vector<32x32xf32>
    %cst = arith.constant dense<0.000000e+00> : vector<16x32xf32>
    %2 = tpu.matmul %0, %1, %cst {dimension_numbers = #tpu.dot_dimension_numbers<[1], [0], [0], [1], [0, 0, 1, 1], [], []>} : vector<16x32xf32>, vector<32x32xf32>, vector<16x32xf32> -> vector<16x32xf32>
    %c0_3 = arith.constant 0 : index
    %c0_4 = arith.constant 0 : index
    %3 = vector.load %arg3[%c0_3, %c0_4] : memref<16x32xf32, #tpu.memory_space<vmem>>, vector<16x32xf32>
    tpu.vector_store %arg3[%c0_3, %c0_4], %2 {strides = array<i32>} : memref<16x32xf32, #tpu.memory_space<vmem>>, vector<16x32xf32>,
    return
  }
  func.func @transform_0(%arg0: i32) -> (i32, i32) {
    %c0_i32 = arith.constant 0 : i32
    %c0_i32_0 = arith.constant 0 : i32
    return %arg0, %c0_i32 : i32, i32
  }
  func.func @transform_1(%arg0: i32) -> (i32, i32) {
    %c0_i32 = arith.constant 0 : i32
    %c0_i32_0 = arith.constant 0 : i32
    %c0_i32_1 = arith.constant 0 : i32
    return %c0_i32, %c0_i32_0 : i32, i32
  }
  func.func @transform_2(%arg0: i32) -> (i32, i32) {
    %c0_i32 = arith.constant 0 : i32
    %c0_i32_0 = arith.constant 0 : i32
    return %arg0, %c0_i32 : i32, i32
  }
}

</mosaic_0001>

<llo_original>
// kernel: tpu_custom_call.1
$region0: #{tpu_custom_call.1}
  #allocation0 [shape = 'u32[]', space=smem, size = 0x4, offset = 0x4, fixed_abs, tag = 'smem constant byte address 0x4 - core index']
  #allocation1 [shape = 'u32[144,128]{1,0:T(1,128)}', space=vmem, size = 0x12000, scoped, tag = 'internal scratch']
  %s0 = inlined_call_operand.hbm [shape: f32[16,32], index: 0, kind: input, shape index: {}]
  %s1 = inlined_call_operand.hbm [shape: f32[32,32], index: 1, kind: input, shape index: {}]
  %s2 = inlined_call_operand.hbm [shape: f32[16,32], index: 2, kind: output, shape index: {}]
  %s3 = sld [smem:[#allocation0]]
  $region26: #{tpu_custom_call.1} parent=0
    _
  %s5 = ssub.s32 1, %s3
  %s6 = scalar_select 0, %s5, %s3
  $region1: #{tpu_custom_call.1} parent=0
    #allocation2 [shape = 'u8[8192]{0}', space=vmem, size = 0x2000, scoped, tag = 'input window, operand 0, single buffered']
    #allocation3 [shape = 's32[1]{0}', space=sflag, size = 0x4, scoped, tag = 'scoped memory for tpu_custom_call.1']
    #allocation4 [shape = 's32[1]{0}', space=sflag, size = 0x4, scoped, tag = 'scoped memory for tpu_custom_call.1']
    #allocation5 [shape = 'u8[16384]{0}', space=vmem, size = 0x4000, scoped, tag = 'input window, operand 1, single buffered']
    #allocation6 [shape = 's32[1]{0}', space=sflag, size = 0x4, scoped, tag = 'scoped memory for tpu_custom_call.1']
    #allocation7 [shape = 'u8[8192]{0}', space=vmem, size = 0x2000, scoped, tag = 'output window, operand 0, single buffered']
    %7 = vsyncpa [#allocation3], 0
    %8 = vsyncpa [#allocation6], 0
    %9 = vsyncpa [#allocation4], 0
    // Predicated region
    $region2: #{tpu_custom_call.1} parent=1 // pred_check
      _
    $region3: #{tpu_custom_call.1} parent=1 // pred_check_branch
      %11 = sbr.rel (0) target = $region5
    $region4: #{tpu_custom_call.1} parent=1 // pred_region
      %s13 = ssub.s32 256, 256
      %14 = vsyncadd [#allocation3], %s13
      %s15 = sshll.u32 [#allocation2], 4
      %s16 = int_to_ptr.vmem [resolvable:$true] %s15
      %21 = dma.hbm_to_vmem [thread:$0]  %s0, 256, %s16, [#allocation3], 128, 128, 8
    $region5: #{tpu_custom_call.1} parent=1 // pred_fallthru
      _
    // Predicated region
    $region6: #{tpu_custom_call.1} parent=1 // pred_check
      _
    $region7: #{tpu_custom_call.1} parent=1 // pred_check_branch
      %23 = sbr.rel (0) target = $region9
    $region8: #{tpu_custom_call.1} parent=1 // pred_region
      %s25 = ssub.s32 512, 512
      %26 = vsyncadd [#allocation6], %s25
      %s27 = sshll.u32 [#allocation5], 4
      %s28 = int_to_ptr.vmem [resolvable:$true] %s27
      %33 = dma.hbm_to_vmem [thread:$0]  %s1, 512, %s28, [#allocation6], 128, 128, 8
    $region9: #{tpu_custom_call.1} parent=1 // pred_fallthru
      _
    // Predicated region
    $region10: #{tpu_custom_call.1} parent=1 // pred_check
      _
    $region11: #{tpu_custom_call.1} parent=1 // pred_check_branch
      %35 = sbr.rel (0) target = $region13
    $region12: #{tpu_custom_call.1} parent=1 // pred_region
      %36 = dma.done [#allocation3], 256
    $region13: #{tpu_custom_call.1} parent=1 // pred_fallthru
      _
    // Predicated region
    $region14: #{tpu_custom_call.1} parent=1 // pred_check
      _
    $region15: #{tpu_custom_call.1} parent=1 // pred_check_branch
      %38 = sbr.rel (0) target = $region17
    $region16: #{tpu_custom_call.1} parent=1 // pred_region
      %39 = dma.done [#allocation6], 512
    $region17: #{tpu_custom_call.1} parent=1 // pred_fallthru
      _
    %v40 = vld [vmem:[#allocation2] sm:$0xff]
    %v41 = vld [vmem:[#allocation2 + $0x8] sm:$0xff]
    %v42 = vld [vmem:[#allocation5] sm:$0xff]
    %v43 = vld [vmem:[#allocation5 + $0x8] sm:$0xff]
    %v44 = vld [vmem:[#allocation5 + $0x10] sm:$0xff]
    %v45 = vld [vmem:[#allocation5 + $0x18] sm:$0xff]
    %vm46 = vcmask 261120
    %v48 = vsel %vm46, %v40, 0
    %v51 = vsel %vm46, %v41, 0
    %53 = vmatprep.subr.mxu0 0.0
    %54 = vmatpush1.msra.mxu0 0.0
    %55 = vmatprep.subr.mxu0 0.0
    %56 = vmatpush1.msra.mxu0 0.0
    %57 = vmatprep.subr.mxu0 0.0
    %58 = vmatpush1.msra.mxu0 0.0
    %59 = vmatprep.subr.mxu0 0.0
    %60 = vmatpush1.msra.mxu0 0.0
    %61 = vmatprep.subr.mxu0 0.0
    %62 = vmatpush1.msra.mxu0 0.0
    %63 = vmatprep.subr.mxu0 0.0
    %64 = vmatpush1.msra.mxu0 0.0
    %65 = vmatprep.subr.mxu0 0.0
    %66 = vmatpush1.msra.mxu0 0.0
    %67 = vmatprep.subr.mxu0 0.0
    %68 = vmatpush1.msra.mxu0 0.0
    %69 = vmatprep.subr.mxu0 0.0
    %70 = vmatpush1.msra.mxu0 0.0
    %71 = vmatprep.subr.mxu0 0.0
    %72 = vmatpush1.msra.mxu0 0.0
    %73 = vmatprep.subr.mxu0 0.0
    %74 = vmatpush1.msra.mxu0 0.0
    %75 = vmatprep.subr.mxu0 0.0
    %76 = vmatpush1.msra.mxu0 0.0
    %77 = vmatprep.subr.mxu0 0.0
    %78 = vmatpush1.msra.mxu0 %v45
    %79 = vmatprep.subr.mxu0 0.0
    %80 = vmatpush1.msra.mxu0 %v44
    %81 = vmatprep.subr.mxu0 0.0
    %82 = vmatpush1.msra.mxu0 %v43
    %83 = vmatprep.subr.mxu0 0.0
    %84 = vmatpush1.msra.mxu0 %v42
    %85 = vmatprep.subr.mxu0 0.0
    %86 = vmatpush2.msra.mxu0 0.0
    %87 = vmatprep.subr.mxu0 0.0
    %88 = vmatpush2.msra.mxu0 0.0
    %89 = vmatprep.subr.mxu0 0.0
    %90 = vmatpush2.msra.mxu0 0.0
    %91 = vmatprep.subr.mxu0 0.0
    %92 = vmatpush2.msra.mxu0 0.0
    %93 = vmatprep.subr.mxu0 0.0
    %94 = vmatpush2.msra.mxu0 0.0
    %95 = vmatprep.subr.mxu0 0.0
    %96 = vmatpush2.msra.mxu0 0.0
    %97 = vmatprep.subr.mxu0 0.0
    %98 = vmatpush2.msra.mxu0 0.0
    %99 = vmatprep.subr.mxu0 0.0
    %100 = vmatpush2.msra.mxu0 0.0
    %101 = vmatprep.subr.mxu0 0.0
    %102 = vmatpush2.msra.mxu0 0.0
    %103 = vmatprep.subr.mxu0 0.0
    %104 = vmatpush2.msra.mxu0 0.0
    %105 = vmatprep.subr.mxu0 0.0
    %106 = vmatpush2.msra.mxu0 0.0
    %107 = vmatprep.subr.mxu0 0.0
    %108 = vmatpush2.msra.mxu0 0.0
    %109 = vmatprep.subr.mxu0 0.0
    %110 = vmatpush2.msra.mxu0 0.0
    %111 = vmatprep.subr.mxu0 0.0
    %112 = vmatpush2.msra.mxu0 0.0
    %113 = vmatprep.subr.mxu0 0.0
    %114 = vmatpush2.msra.mxu0 0.0
    %115 = vmatprep.subr.mxu0 0.0
    %116 = vmatpush2.msra.mxu0 0.0
    %117 = vmatprep.mubr.f32.mxu0 0.0
    %118 = vmatmul.mubr.f32.gmra.mxu0 %v48
    %v119 = vpop.f32.mrf.mxu0
    %v120 = vadd.f32 0.0, %v119
    %v121 = vpop.f32.mrf.mxu0
    %122 = vmatprep.mubr.f32.mxu0 0.0
    %123 = vmatmul.mubr.f32.gmra.mxu0 %v51
    %v124 = vpop.f32.mrf.mxu0
    %v125 = vadd.f32 0.0, %v124
    %v126 = vpop.f32.mrf.mxu0
    %127 = vdwg.mxu0
    %128 = vst.msk [vmem:[#allocation7] sm:$0xff] %vm46, %v120
    %129 = vst.msk [vmem:[#allocation7 + $0x8] sm:$0xff] %vm46, %v125
    // Predicated region
    $region18: #{tpu_custom_call.1} parent=1 // pred_check
      _
    $region19: #{tpu_custom_call.1} parent=1 // pred_check_branch
      %131 = sbr.rel (0) target = $region21
    $region20: #{tpu_custom_call.1} parent=1 // pred_region
      %s133 = ssub.s32 256, 256
      %134 = vsyncadd [#allocation4], %s133
      %s135 = sshll.u32 [#allocation7], 4
      %s136 = int_to_ptr.vmem [resolvable:$true] %s135
      %141 = dma.vmem_to_hbm [thread:$0]  %s136, 256, %s2, [#allocation4], 128, 128, 8
    $region21: #{tpu_custom_call.1} parent=1 // pred_fallthru
      _
    // Predicated region
    $region22: #{tpu_custom_call.1} parent=1 // pred_check
      _
    $region23: #{tpu_custom_call.1} parent=1 // pred_check_branch
      %143 = sbr.rel (0) target = $region25
    $region24: #{tpu_custom_call.1} parent=1 // pred_region
      %144 = dma.done [#allocation4], 256
    $region25: #{tpu_custom_call.1} parent=1 // pred_fallthru
      _
    %145 = vsyncpa [#allocation3], 1
    %146 = vsyncpa [#allocation6], 1
    %147 = vsyncpa [#allocation4], 1

</llo_original>
